<compile_context>
chip_gen: v7x
topology: tpu7x:2x2x1
jax: 0.10.0
libtpu: 0.0.40
codegen_flags: <defaults>
</compile_context>

<pallas_src>
import functools

import jax
import jax.numpy as jnp
from jax import lax
from jax.experimental import pallas as pl
from jax.experimental.pallas import tpu as pltpu


def _ln_kernel(x_ref, w_ref, *rest, with_bias: bool, c: int):
    if with_bias:
        b_ref, o_ref = rest
    else:
        (o_ref,) = rest

    x = x_ref[...].astype(jnp.float32)                 # (BB, C, T)
    inv_c = jnp.float32(1.0 / c)

    # Single-pass moments over the channel (sublane) axis.
    s1 = jnp.sum(x, axis=1, keepdims=True)             # (BB, 1, T)
    s2 = jnp.sum(x * x, axis=1, keepdims=True)         # (BB, 1, T)
    mu = s1 * inv_c
    var = jnp.maximum(s2 * inv_c - mu * mu, 0.0)       # unbiased=False
    inv = lax.rsqrt(var + 1e-5)                        # EUP

    w = w_ref[...].astype(jnp.float32)[None, :, :]     # (1, C, 1)
    if with_bias:
        b = b_ref[...].astype(jnp.float32)[None, :, :]
        y = (x - mu) * inv * w + b
    else:
        # BiasFree: variance is about the mean, but the mean is NOT subtracted.
        y = x * inv * w
    o_ref[...] = y.astype(o_ref.dtype)


def _pick_blocks(b: int, c: int, hw: int, itemsize: int):
    """~2 MiB VMEM input blocks (counting sublane padding).

    Lane dim is a multiple of 128 (or the full H*W extent).  If the full
    spatial extent does not reach the byte target, fold the batch axis into
    the block too (fewer grid steps -> less per-step overhead).
    """
    sublane = {1: 32, 2: 16, 4: 8}.get(itemsize, 8)
    padded_c = -(-c // sublane) * sublane
    target_bytes = 2 << 20

    block_hw = (target_bytes // (padded_c * itemsize)) // 128 * 128
    block_hw = max(128, block_hw)
    if block_hw >= hw:
        block_hw = hw                                  # full extent is always legal
        per_batch = padded_c * max(hw, 1) * itemsize
        block_b = int(max(1, min(b, target_bytes // max(per_batch, 1))))
    else:
        block_b = 1
    return block_b, block_hw


def layernorm_restormer(x, weight, bias=None, *, layernorm_type="WithBias"):
    """x: (B, C, H, W) -> (B, C, H, W), normalized over C per spatial location."""
    b, c, h, w_dim = x.shape
    hw = h * w_dim
    with_bias = layernorm_type != "BiasFree"

    x3 = x.reshape(b, c, hw)                           # free contiguous reshape
    itemsize = jnp.dtype(x.dtype).itemsize
    block_b, block_hw = _pick_blocks(b, c, hw, itemsize)
    # Ragged trailing blocks (batch or spatial) are fine: the reduction is over
    # C only, and out-of-bounds lanes/rows are masked on write-back.
    grid = (pl.cdiv(b, block_b), pl.cdiv(hw, block_hw))

    in_specs = [
        pl.BlockSpec((block_b, c, block_hw), lambda bi, ji: (bi, 0, ji)),
        pl.BlockSpec((c, 1), lambda bi, ji: (0, 0)),
    ]
    args = [x3, weight.reshape(c, 1)]
    if with_bias:
        in_specs.append(pl.BlockSpec((c, 1), lambda bi, ji: (0, 0)))
        args.append(bias.reshape(c, 1))

    kernel = functools.partial(_ln_kernel, with_bias=with_bias, c=c)

    out = pl.pallas_call(
        kernel,
        out_shape=jax.ShapeDtypeStruct((b, c, hw), x.dtype),
        grid_spec=pltpu.PrefetchScalarGridSpec(
            num_scalar_prefetch=0,
            grid=grid,
            in_specs=in_specs,
            out_specs=pl.BlockSpec((block_b, c, block_hw),
                                   lambda bi, ji: (bi, 0, ji)),
        ),
        compiler_params=pltpu.CompilerParams(
            dimension_semantics=("parallel", "parallel"),
            vmem_limit_bytes=32 << 20),
    )(*args)

    return out.reshape(b, c, h, w_dim)


def _reference(x, weight, bias, with_bias):
    b, c, h, w = x.shape
    x3d = jnp.transpose(x, (0, 2, 3, 1)).reshape(b, h * w, c).astype(jnp.float32)
    mu = jnp.mean(x3d, axis=-1, keepdims=True)
    var = jnp.mean((x3d - mu) ** 2, axis=-1, keepdims=True)
    if with_bias:
        y = (x3d - mu) / jnp.sqrt(var + 1e-5) * weight + bias
    else:
        y = x3d / jnp.sqrt(var + 1e-5) * weight
    return y.reshape(b, h, w, c).transpose(0, 3, 1, 2).astype(x.dtype)


if __name__ == "__main__":
    key = jax.random.PRNGKey(0)
    B, C, H, W = 2, 4, 16, 16

    kx, kw, kb = jax.random.split(key, 3)
    x = jax.random.normal(kx, (B, C, H, W), dtype=jnp.float32)
    # Deterministic "trained-looking" params (module init is ones/zeros; perturb
    # deterministically so scale/shift paths are actually exercised).
    weight = jnp.ones((C,), jnp.float32) + 0.1 * jax.random.normal(kw, (C,), jnp.float32)
    bias = 0.1 * jax.random.normal(kb, (C,), jnp.float32)

    # WithBias variant
    y_wb = layernorm_restormer(x, weight, bias, layernorm_type="WithBias")
    y_wb = jax.block_until_ready(y_wb)
    ref_wb = _reference(x, weight, bias, with_bias=True)
    assert y_wb.shape == (B, C, H, W)
    assert jnp.allclose(y_wb, ref_wb, atol=1e-4, rtol=1e-4)

    # BiasFree variant
    y_bf = layernorm_restormer(x, weight, None, layernorm_type="BiasFree")
    y_bf = jax.block_until_ready(y_bf)
    ref_bf = _reference(x, weight, bias, with_bias=False)
    assert y_bf.shape == (B, C, H, W)
    assert jnp.allclose(y_bf, ref_bf, atol=1e-4, rtol=1e-4)

    print("KERNEL_OK")
</pallas_src>

<mosaic_0001>
module attributes {stable_mosaic.version = 11 : i64} {
  func.func @_ln_kernel(%arg0: i32, %arg1: i32, %arg2: memref<2x4x256xf32, #tpu.memory_space<vmem>>, %arg3: memref<4x1xf32, #tpu.memory_space<vmem>>, %arg4: memref<4x1xf32, #tpu.memory_space<vmem>>, %arg5: memref<2x4x256xf32, #tpu.memory_space<vmem>>) attributes {dimension_semantics = [#tpu.dimension_semantics<parallel>, #tpu.dimension_semantics<parallel>], iteration_bounds = array<i64: 1, 1>, scalar_prefetch = 0 : i64, scratch_operands = 0 : i64, tpu.core_type = #tpu.core_type<tc>, window_params = [{transform_indices = @transform_0, window_bounds = array<i64: 2, 4, 256>}, {pipeline_mode = #tpu.pipeline_mode<synchronous>, transform_indices = @transform_1, window_bounds = array<i64: 4, 1>}, {pipeline_mode = #tpu.pipeline_mode<synchronous>, transform_indices = @transform_2, window_bounds = array<i64: 4, 1>}, {transform_indices = @transform_3, window_bounds = array<i64: 2, 4, 256>}]} {
    %c0 = arith.constant 0 : index
    %c0_0 = arith.constant 0 : index
    %c0_1 = arith.constant 0 : index
    %0 = vector.load %arg2[%c0, %c0_0, %c0_1] : memref<2x4x256xf32, #tpu.memory_space<vmem>>, vector<2x4x256xf32>
    %cst = arith.constant dense<0.000000e+00> : vector<2x256xf32>
    %1 = vector.multi_reduction <add>, %0, %cst [1] : vector<2x4x256xf32> to vector<2x256xf32>
    %2 = vector.shape_cast %1 : vector<2x256xf32> to vector<2x1x256xf32>
    %3 = arith.mulf %0, %0 : vector<2x4x256xf32>
    %cst_2 = arith.constant dense<0.000000e+00> : vector<2x256xf32>
    %4 = vector.multi_reduction <add>, %3, %cst_2 [1] : vector<2x4x256xf32> to vector<2x256xf32>
    %5 = vector.shape_cast %4 : vector<2x256xf32> to vector<2x1x256xf32>
    %cst_3 = arith.constant 2.500000e-01 : f32
    %6 = vector.broadcast %cst_3 : f32 to vector<2x1x256xf32>
    %7 = arith.mulf %2, %6 : vector<2x1x256xf32>
    %cst_4 = arith.constant 2.500000e-01 : f32
    %8 = vector.broadcast %cst_4 : f32 to vector<2x1x256xf32>
    %9 = arith.mulf %5, %8 : vector<2x1x256xf32>
    %10 = arith.mulf %7, %7 : vector<2x1x256xf32>
    %11 = arith.subf %9, %10 : vector<2x1x256xf32>
    %cst_5 = arith.constant 0.000000e+00 : f32
    %12 = vector.broadcast %cst_5 : f32 to vector<2x1x256xf32>
    %13 = arith.maximumf %11, %12 : vector<2x1x256xf32>
    %cst_6 = arith.constant 9.99999974E-6 : f32
    %14 = vector.broadcast %cst_6 : f32 to vector<2x1x256xf32>
    %15 = arith.addf %13, %14 : vector<2x1x256xf32>
    %16 = math.rsqrt %15 : vector<2x1x256xf32>
    %c0_7 = arith.constant 0 : index
    %c0_8 = arith.constant 0 : index
    %17 = vector.load %arg3[%c0_7, %c0_8] : memref<4x1xf32, #tpu.memory_space<vmem>>, vector<4x1xf32>
    %18 = vector.shape_cast %17 : vector<4x1xf32> to vector<1x4x1xf32>
    %c0_9 = arith.constant 0 : index
    %c0_10 = arith.constant 0 : index
    %19 = vector.load %arg4[%c0_9, %c0_10] : memref<4x1xf32, #tpu.memory_space<vmem>>, vector<4x1xf32>
    %20 = vector.shape_cast %19 : vector<4x1xf32> to vector<1x4x1xf32>
    %21 = vector.broadcast %7 : vector<2x1x256xf32> to vector<2x4x256xf32>
    %22 = arith.subf %0, %21 : vector<2x4x256xf32>
    %23 = vector.broadcast %16 : vector<2x1x256xf32> to vector<2x4x256xf32>
    %24 = arith.mulf %22, %23 : vector<2x4x256xf32>
    %25 = vector.broadcast %18 : vector<1x4x1xf32> to vector<2x4x256xf32>
    %26 = arith.mulf %24, %25 : vector<2x4x256xf32>
    %27 = vector.broadcast %20 : vector<1x4x1xf32> to vector<2x4x256xf32>
    %28 = arith.addf %26, %27 : vector<2x4x256xf32>
    %c0_11 = arith.constant 0 : index
    %c0_12 = arith.constant 0 : index
    %c0_13 = arith.constant 0 : index
    %29 = vector.load %arg5[%c0_11, %c0_12, %c0_13] : memref<2x4x256xf32, #tpu.memory_space<vmem>>, vector<2x4x256xf32>
    tpu.vector_store %arg5[%c0_11, %c0_12, %c0_13], %28 {strides = array<i32>} : memref<2x4x256xf32, #tpu.memory_space<vmem>>, vector<2x4x256xf32>,
    return
  }
  func.func @transform_0(%arg0: i32, %arg1: i32) -> (i32, i32, i32) {
    %c0_i32 = arith.constant 0 : i32
    %c0_i32_0 = arith.constant 0 : i32
    return %arg0, %c0_i32, %arg1 : i32, i32, i32
  }
  func.func @transform_1(%arg0: i32, %arg1: i32) -> (i32, i32) {
    %c0_i32 = arith.constant 0 : i32
    %c0_i32_0 = arith.constant 0 : i32
    %c0_i32_1 = arith.constant 0 : i32
    return %c0_i32, %c0_i32_0 : i32, i32
  }
  func.func @transform_2(%arg0: i32, %arg1: i32) -> (i32, i32) {
    %c0_i32 = arith.constant 0 : i32
    %c0_i32_0 = arith.constant 0 : i32
    %c0_i32_1 = arith.constant 0 : i32
    return %c0_i32, %c0_i32_0 : i32, i32
  }
  func.func @transform_3(%arg0: i32, %arg1: i32) -> (i32, i32, i32) {
    %c0_i32 = arith.constant 0 : i32
    %c0_i32_0 = arith.constant 0 : i32
    return %arg0, %c0_i32, %arg1 : i32, i32, i32
  }
}

</mosaic_0001>

<llo_original>
// kernel: tpu_custom_call.1
$region0: #{tpu_custom_call.1}
  #allocation0 [shape = 'u32[]', space=smem, size = 0x4, offset = 0x4, fixed_abs, tag = 'smem constant byte address 0x4 - core index']
  #allocation1 [shape = 'u32[144,128]{1,0:T(1,128)}', space=vmem, size = 0x12000, scoped, tag = 'internal scratch']
  %s0 = inlined_call_operand.hbm [shape: f32[2,4,256], index: 0, kind: input, shape index: {}]
  %s1 = inlined_call_operand.vmem [shape: f32[4,1], index: 1, kind: input, shape index: {}]
  %s2 = inlined_call_operand.vmem [shape: f32[4,1], index: 2, kind: input, shape index: {}]
  %s3 = inlined_call_operand.hbm [shape: f32[2,4,256], index: 3, kind: output, shape index: {}]
  %s4 = sld [smem:[#allocation0]]
  $region26: #{tpu_custom_call.1} parent=0
    _
  %s6 = ssub.s32 1, %s4
  %s7 = scalar_select 0, %s6, %s4
  $region1: #{tpu_custom_call.1} parent=0
    #allocation2 [shape = 'u8[8192]{0}', space=vmem, size = 0x2000, scoped, tag = 'input window, operand 0, single buffered']
    #allocation3 [shape = 's32[1]{0}', space=sflag, size = 0x4, scoped, tag = 'scoped memory for tpu_custom_call.1']
    #allocation4 [shape = 's32[1]{0}', space=sflag, size = 0x4, scoped, tag = 'scoped memory for tpu_custom_call.1']
    #allocation5 [shape = 'u8[8192]{0}', space=vmem, size = 0x2000, scoped, tag = 'output window, operand 0, single buffered']
    %8 = vsyncpa [#allocation3], 0
    %9 = vsyncpa [#allocation4], 0
    // Predicated region
    $region2: #{tpu_custom_call.1} parent=1 // pred_check
      _
    $region3: #{tpu_custom_call.1} parent=1 // pred_check_branch
      %11 = sbr.rel (0) target = $region5
    $region4: #{tpu_custom_call.1} parent=1 // pred_region
      %s13 = ssub.s32 256, 256
      %14 = vsyncadd [#allocation3], %s13
      %s15 = sshll.u32 [#allocation2], 4
      %s16 = int_to_ptr.vmem [resolvable:$true] %s15
      %21 = dma.hbm_to_vmem [thread:$0]  %s0, 256, %s16, [#allocation3], 128, 128, 8
    $region5: #{tpu_custom_call.1} parent=1 // pred_fallthru
      _
    // Predicated region
    $region6: #{tpu_custom_call.1} parent=1 // pred_check
      _
    $region7: #{tpu_custom_call.1} parent=1 // pred_check_branch
      %23 = sbr.rel (0) target = $region9
    $region8: #{tpu_custom_call.1} parent=1 // pred_region
      _
    $region9: #{tpu_custom_call.1} parent=1 // pred_fallthru
      _
    // Predicated region
    $region10: #{tpu_custom_call.1} parent=1 // pred_check
      _
    $region11: #{tpu_custom_call.1} parent=1 // pred_check_branch
      %25 = sbr.rel (0) target = $region13
    $region12: #{tpu_custom_call.1} parent=1 // pred_region
      _
    $region13: #{tpu_custom_call.1} parent=1 // pred_fallthru
      _
    // Predicated region
    $region14: #{tpu_custom_call.1} parent=1 // pred_check
      _
    $region15: #{tpu_custom_call.1} parent=1 // pred_check_branch
      %27 = sbr.rel (0) target = $region17
    $region16: #{tpu_custom_call.1} parent=1 // pred_region
      %28 = dma.done [#allocation3], 256
    $region17: #{tpu_custom_call.1} parent=1 // pred_fallthru
      _
    %v29 = vld [vmem:[#allocation2] sm:$0xff]
    %v30 = vld [vmem:[#allocation2 + $0x8] sm:$0xff]
    %v33 = vcombine.high %v29, %v29
    %v34 = vcombine.high %v30, %v30
    %vm37 = vcmask 1043456
    %v38 = vsel %vm37, %v29, 0.0
    %v39 = vrot.slane %v38, 4
    %v40 = vadd.f32 %v38, %v39
    %v41 = vrot.slane %v40, 2
    %v42 = vadd.f32 %v40, %v41
    %v43 = vrot.slane %v42, 1
    %v44 = vadd.f32 %v42, %v43
    %v45 = vsel %vm37, %v33, 0.0
    %v46 = vrot.slane %v45, 4
    %v47 = vadd.f32 %v45, %v46
    %v48 = vrot.slane %v47, 2
    %v49 = vadd.f32 %v47, %v48
    %v50 = vrot.slane %v49, 1
    %v51 = vadd.f32 %v49, %v50
    %v52 = vsel %vm37, %v30, 0.0
    %v53 = vrot.slane %v52, 4
    %v54 = vadd.f32 %v52, %v53
    %v55 = vrot.slane %v54, 2
    %v56 = vadd.f32 %v54, %v55
    %v57 = vrot.slane %v56, 1
    %v58 = vadd.f32 %v56, %v57
    %v59 = vsel %vm37, %v34, 0.0
    %v60 = vrot.slane %v59, 4
    %v61 = vadd.f32 %v59, %v60
    %v62 = vrot.slane %v61, 2
    %v63 = vadd.f32 %v61, %v62
    %v64 = vrot.slane %v63, 1
    %v65 = vadd.f32 %v63, %v64
    %v66 = vmul.f32 %v29, %v29
    %v67 = vmul.f32 %v30, %v30
    %v70 = vcombine.high %v66, %v66
    %v71 = vcombine.high %v67, %v67
    %v74 = vsel %vm37, %v66, 0.0
    %v75 = vrot.slane %v74, 4
    %v76 = vadd.f32 %v74, %v75
    %v77 = vrot.slane %v76, 2
    %v78 = vadd.f32 %v76, %v77
    %v79 = vrot.slane %v78, 1
    %v80 = vadd.f32 %v78, %v79
    %v81 = vsel %vm37, %v70, 0.0
    %v82 = vrot.slane %v81, 4
    %v83 = vadd.f32 %v81, %v82
    %v84 = vrot.slane %v83, 2
    %v85 = vadd.f32 %v83, %v84
    %v86 = vrot.slane %v85, 1
    %v87 = vadd.f32 %v85, %v86
    %v88 = vsel %vm37, %v67, 0.0
    %v89 = vrot.slane %v88, 4
    %v90 = vadd.f32 %v88, %v89
    %v91 = vrot.slane %v90, 2
    %v92 = vadd.f32 %v90, %v91
    %v93 = vrot.slane %v92, 1
    %v94 = vadd.f32 %v92, %v93
    %v95 = vsel %vm37, %v71, 0.0
    %v96 = vrot.slane %v95, 4
    %v97 = vadd.f32 %v95, %v96
    %v98 = vrot.slane %v97, 2
    %v99 = vadd.f32 %v97, %v98
    %v100 = vrot.slane %v99, 1
    %v101 = vadd.f32 %v99, %v100
    %v102 = vmul.f32 %v44, 0.25
    %v103 = vmul.f32 %v51, 0.25
    %v104 = vmul.f32 %v58, 0.25
    %v105 = vmul.f32 %v65, 0.25
    %v106 = vmul.f32 %v80, 0.25
    %v107 = vmul.f32 %v87, 0.25
    %v108 = vmul.f32 %v94, 0.25
    %v109 = vmul.f32 %v101, 0.25
    %v110 = vmul.f32 %v102, %v102
    %v111 = vmul.f32 %v103, %v103
    %v112 = vmul.f32 %v104, %v104
    %v113 = vmul.f32 %v105, %v105
    %v114 = vsub.f32 %v106, %v110
    %v115 = vsub.f32 %v107, %v111
    %v116 = vsub.f32 %v108, %v112
    %v117 = vsub.f32 %v109, %v113
    %v118 = vmax.f32 %v114, 0.0
    %v119 = vmax.f32 %v115, 0.0
    %v120 = vmax.f32 %v116, 0.0
    %v121 = vmax.f32 %v117, 0.0
    %v122 = vadd.f32 %v118, 1e-05
    %v123 = vadd.f32 %v119, 1e-05
    %v124 = vadd.f32 %v120, 1e-05
    %v125 = vadd.f32 %v121, 1e-05
    %v126 = vrsqrt.pop %v122
    %v127 = vrsqrt.pop %v123
    %v128 = vrsqrt.pop %v124
    %v129 = vrsqrt.pop %v125
    %v130 = vld [vmem:[%s1] sm:$0xf]
    %v131 = vld [vmem:[%s2] sm:$0xf]
    %v136 = vcombine.low %v102, %v103
    %v137 = vcombine.low %v104, %v105
    %v140 = vsub.f32 %v29, %v136
    %v141 = vsub.f32 %v30, %v137
    %v146 = vcombine.low %v126, %v127
    %v147 = vcombine.low %v128, %v129
    %v150 = vmul.f32 %v140, %v146
    %v151 = vmul.f32 %v141, %v147
    %153 = vset.pattern.permute.xlu0 0
    %154 = vperm.xlu0 %153, %v130
    %v155 = vpop.permute.xlu0 %154
    %v157 = vunpack.c.l.s4 839922192
    %v158 = vunpack.c.0.s8 %v157
    %v159 = vlaneseq
    %v160 = vshrl.u32 %v159, 7
    %v161 = vsub.s32 %v158, %v160
    %v162 = vrot.slane %v155, %v161
    %v164 = vmul.f32 %v150, %v162
    %v165 = vmul.f32 %v151, %v162
    %167 = vset.pattern.permute.xlu0 0
    %168 = vperm.xlu0 %167, %v131
    %v169 = vpop.permute.xlu0 %168
    %v171 = vunpack.c.l.s4 839922192
    %v172 = vunpack.c.0.s8 %v171
    %v173 = vlaneseq
    %v174 = vshrl.u32 %v173, 7
    %v175 = vsub.s32 %v172, %v174
    %v176 = vrot.slane %v169, %v175
    %v178 = vadd.f32 %v164, %v176
    %v179 = vadd.f32 %v165, %v176
    %180 = vst [vmem:[#allocation5] sm:$0xff] %v178
    %181 = vst [vmem:[#allocation5 + $0x8] sm:$0xff] %v179
    // Predicated region
    $region18: #{tpu_custom_call.1} parent=1 // pred_check
      _
    $region19: #{tpu_custom_call.1} parent=1 // pred_check_branch
      %183 = sbr.rel (0) target = $region21
    $region20: #{tpu_custom_call.1} parent=1 // pred_region
      %s185 = ssub.s32 256, 256
      %186 = vsyncadd [#allocation4], %s185
      %s187 = sshll.u32 [#allocation5], 4
      %s188 = int_to_ptr.vmem [resolvable:$true] %s187
      %193 = dma.vmem_to_hbm [thread:$0]  %s188, 256, %s3, [#allocation4], 128, 128, 8
    $region21: #{tpu_custom_call.1} parent=1 // pred_fallthru
      _
    // Predicated region
    $region22: #{tpu_custom_call.1} parent=1 // pred_check
      _
    $region23: #{tpu_custom_call.1} parent=1 // pred_check_branch
      %195 = sbr.rel (0) target = $region25
    $region24: #{tpu_custom_call.1} parent=1 // pred_region
      %196 = dma.done [#allocation4], 256
    $region25: #{tpu_custom_call.1} parent=1 // pred_fallthru
      _
    %197 = vsyncpa [#allocation3], 1
    %198 = vsyncpa [#allocation4], 1

</llo_original>
